<compile_context>
chip_gen: v7x
topology: tpu7x:2x2x1
jax: 0.10.0
libtpu: 0.0.40
codegen_flags: <defaults>
</compile_context>

<pallas_src>
import functools

import numpy as np

import jax
import jax.numpy as jnp
from jax.experimental import pallas as pl
from jax.experimental.pallas import tpu as pltpu


def _focal_loss_kernel(x_ref, t_ref, out_ref, *, num_classes, gamma,
                       ignore_index, alpha):
    """Grid = (N, num_pixel_tiles); both axes fully parallel.

    x_ref:   (C, TR, 128)  logits (native dtype), class axis leading.
    t_ref:   (TR, 128)     int32 targets, -1 marks padded (invalid) pixels.
    out_ref: (1, 1)        f32 partial loss sum for this (batch, tile).
    """
    t_raw = t_ref[...]                                   # (TR, 128) int32
    valid = t_raw >= 0                                   # padding sentinel
    keep = jnp.logical_and(
        valid, jnp.logical_and(t_raw != ignore_index, t_raw != 15))
    # target = target * ((target != ignore_index) & (target != 15))
    t = jnp.where(keep, t_raw, 0)

    # Class-axis max, unrolled over the static leading C axis: each step is a
    # plain elementwise VPU op on full (TR, 128) tiles (no cross-sublane XLU).
    m = x_ref[0].astype(jnp.float32)
    for k in range(1, num_classes):
        m = jnp.maximum(m, x_ref[k].astype(jnp.float32))

    s = jnp.zeros_like(m)                                # sum(exp(z))
    z_sel = jnp.zeros_like(m)                            # z at the target class
    at = jnp.zeros_like(m) if alpha is not None else None
    for k in range(num_classes):
        zk = x_ref[k].astype(jnp.float32) - m
        s = s + jnp.exp(zk)
        hit = t == k
        z_sel = jnp.where(hit, zk, z_sel)
        if alpha is not None:
            at = jnp.where(hit, jnp.float32(alpha[k]), at)

    logpt = z_sel - jnp.log(s)                           # stable log-softmax gather
    pt = jnp.exp(logpt)
    if alpha is not None:
        logpt = logpt * at

    u = jnp.maximum(1.0 - pt, 0.0)                       # clamp: pt may round > 1
    if gamma == 0.0:
        w = jnp.ones_like(u)
    elif float(gamma).is_integer():
        w = jax.lax.integer_pow(u, int(gamma))           # no exp/log, no NaN
    else:
        w = u ** jnp.float32(gamma)

    contrib = jnp.where(valid, w * logpt, 0.0)
    out_ref[...] = -jnp.sum(contrib, keepdims=True)      # (1, 1) partial sum


def _pick_tile_r(r, c, itemsize, max_rows=256, vmem_budget_bytes=8 << 20):
    """Rows of 128 pixels per step: large, VMEM-budgeted, multiple of 8."""
    # Double-buffered x block + double-buffered int32 target block per row.
    per_row = 2 * 128 * (c * itemsize + 4)
    budget_rows = max(8, vmem_budget_bytes // per_row)
    tile = min(r, max_rows, budget_rows)
    if tile >= r:
        return r                                          # full pixel axis
    return max(8, (tile // 8) * 8)                        # (8,128) alignment


def focal_loss(x_nchw, target_nhw, *, gamma=0.0, alpha=None,
               size_average=True, ignore_index=0, max_rows_per_step=256):
    """Focal loss matching FocalLoss.forward semantics (NCHW logits)."""
    n, c, h, w = x_nchw.shape
    hw = h * w
    lanes = 128

    r = pl.cdiv(hw, lanes)
    itemsize = jnp.dtype(x_nchw.dtype).itemsize
    tile_r = _pick_tile_r(r, c, itemsize, max_rows=max_rows_per_step)
    num_tiles = pl.cdiv(r, tile_r)
    r_pad = num_tiles * tile_r
    hw_pad = r_pad * lanes

    # Repack pixels densely onto (rows-of-128, 128).  Padded pixels get
    # target = -1 and are masked out inside the kernel.
    x_flat = x_nchw.reshape(n, c, hw)                     # native dtype (f32/bf16)
    t_flat = target_nhw.reshape(n, hw).astype(jnp.int32)
    if hw_pad != hw:
        x_flat = jnp.pad(x_flat, ((0, 0), (0, 0), (0, hw_pad - hw)))
        t_flat = jnp.pad(t_flat, ((0, 0), (0, hw_pad - hw)), constant_values=-1)
    x_r = x_flat.reshape(n, c, r_pad, lanes)
    tgt = t_flat.reshape(n, r_pad, lanes)
    # TODO(synk): targets could be cast to int8 (C < 256) to trim HBM traffic
    # further for very small C.

    # alpha is an nn.Module constructor constant -> bake as immediates.
    if alpha is None:
        alpha_t = None
    elif isinstance(alpha, (float, int)) and not isinstance(alpha, bool):
        assert c == 2, "scalar alpha builds [alpha, 1-alpha]; requires 2 classes"
        alpha_t = (float(alpha), 1.0 - float(alpha))
    else:
        a = np.asarray(alpha, dtype=np.float32).reshape(-1)
        assert a.shape[0] == c, "per-class alpha must have C entries"
        alpha_t = tuple(float(v) for v in a)

    kernel = functools.partial(
        _focal_loss_kernel,
        num_classes=c,
        gamma=float(gamma),
        ignore_index=int(ignore_index),
        alpha=alpha_t,
    )

    # TODO(synk): if DMA is still exposed for large C, add
    # pipeline_mode=pl.Buffered(3) on the x BlockSpec.
    partials = pl.pallas_call(
        kernel,
        out_shape=jax.ShapeDtypeStruct((n, num_tiles, 1, 1), jnp.float32),
        grid_spec=pltpu.PrefetchScalarGridSpec(
            num_scalar_prefetch=0,
            grid=(n, num_tiles),
            in_specs=[
                # batch dim squeezed -> kernel sees (C, tile_r, 128); the class
                # axis is a leading, non-layout-tiled block dim (no padding).
                pl.BlockSpec((None, c, tile_r, lanes), lambda b, i: (b, 0, i, 0)),
                pl.BlockSpec((None, tile_r, lanes), lambda b, i: (b, i, 0)),
            ],
            out_specs=pl.BlockSpec((None, None, 1, 1),
                                   lambda b, i: (b, i, 0, 0)),
        ),
        compiler_params=pltpu.CompilerParams(
            dimension_semantics=("parallel", "parallel"),
            vmem_limit_bytes=32 * 1024 * 1024),
    )(x_r, tgt)

    total = jnp.sum(partials)
    if size_average:
        total = total / jnp.float32(n * hw)
    return total


def _focal_loss_ref(x_nchw, target_nhw, *, gamma, alpha, size_average,
                    ignore_index):
    n, c, h, w = x_nchw.shape
    t = target_nhw.astype(jnp.int32)
    t = t * jnp.logical_and(t != ignore_index, t != 15).astype(jnp.int32)
    xf = jnp.transpose(x_nchw, (0, 2, 3, 1)).reshape(-1, c).astype(jnp.float32)
    tf = t.reshape(-1)
    logp = jax.nn.log_softmax(xf, axis=1)
    logpt = jnp.take_along_axis(logp, tf[:, None], axis=1)[:, 0]
    pt = jnp.exp(logpt)
    if alpha is not None:
        if isinstance(alpha, (float, int)) and not isinstance(alpha, bool):
            a = jnp.array([alpha, 1.0 - alpha], jnp.float32)
        else:
            a = jnp.asarray(alpha, jnp.float32)
        logpt = logpt * a[tf]
    loss = -((1.0 - pt) ** gamma) * logpt
    return jnp.mean(loss) if size_average else jnp.sum(loss)


if __name__ == "__main__":
    key = jax.random.PRNGKey(0)
    k1, k2, k3, k4, k5, k6 = jax.random.split(key, 6)

    # 1) main config: N=2, C=4, 16x16, per-class alpha, mean reduction.
    x1 = jax.random.normal(k1, (2, 4, 16, 16), dtype=jnp.float32)
    t1 = jax.random.randint(k2, (2, 16, 16), 0, 4, dtype=jnp.int32)
    out1 = jax.block_until_ready(
        focal_loss(x1, t1, gamma=2.0, alpha=[0.1, 0.2, 0.3, 0.4],
                   size_average=True, ignore_index=0))
    ref1 = _focal_loss_ref(x1, t1, gamma=2.0, alpha=[0.1, 0.2, 0.3, 0.4],
                           size_average=True, ignore_index=0)
    assert jnp.allclose(out1, ref1, rtol=1e-5, atol=1e-5), (out1, ref1)

    # 2) padding path (H*W not a multiple of 128), sum reduction, no alpha.
    x2 = jax.random.normal(k3, (2, 4, 10, 10), dtype=jnp.float32)
    t2 = jax.random.randint(k4, (2, 10, 10), 0, 4, dtype=jnp.int32)
    out2 = jax.block_until_ready(
        focal_loss(x2, t2, gamma=2.0, alpha=None, size_average=False,
                   ignore_index=0))
    ref2 = _focal_loss_ref(x2, t2, gamma=2.0, alpha=None,
                           size_average=False, ignore_index=0)
    assert jnp.allclose(out2, ref2, rtol=1e-5, atol=1e-5), (out2, ref2)

    # 3) multi-tile inner grid, scalar alpha (2 classes), gamma=0, N=1.
    x3 = jax.random.normal(k5, (1, 2, 64, 64), dtype=jnp.float32)
    t3 = jax.random.randint(k6, (1, 64, 64), 0, 2, dtype=jnp.int32)
    out3 = jax.block_until_ready(
        focal_loss(x3, t3, gamma=0, alpha=0.25, size_average=True,
                   ignore_index=0, max_rows_per_step=8))
    ref3 = _focal_loss_ref(x3, t3, gamma=0, alpha=0.25,
                           size_average=True, ignore_index=0)
    assert jnp.allclose(out3, ref3, rtol=1e-5, atol=1e-5), (out3, ref3)

    print("KERNEL_OK")
</pallas_src>

<mosaic_0001>
module attributes {stable_mosaic.version = 11 : i64} {
  func.func @_focal_loss_kernel(%arg0: i32, %arg1: i32, %arg2: memref<1x4x2x128xf32, #tpu.memory_space<vmem>>, %arg3: memref<1x2x128xi32, #tpu.memory_space<vmem>>, %arg4: memref<1x1x1x1xf32, #tpu.memory_space<vmem>>) attributes {dimension_semantics = [#tpu.dimension_semantics<parallel>, #tpu.dimension_semantics<parallel>], iteration_bounds = array<i64: 2, 1>, scalar_prefetch = 0 : i64, scratch_operands = 0 : i64, tpu.core_type = #tpu.core_type<tc>, window_params = [{transform_indices = @transform_0, window_bounds = array<i64: 1, 4, 2, 128>}, {transform_indices = @transform_1, window_bounds = array<i64: 1, 2, 128>}, {transform_indices = @transform_2, window_bounds = array<i64: 1, 1, 1, 1>}]} {
    %c0 = arith.constant 0 : index
    %c0_0 = arith.constant 0 : index
    %c0_1 = arith.constant 0 : index
    %0 = vector.load %arg3[%c0, %c0_0, %c0_1] : memref<1x2x128xi32, #tpu.memory_space<vmem>>, vector<1x2x128xi32>
    %1 = vector.shape_cast %0 : vector<1x2x128xi32> to vector<2x128xi32>
    %c0_i32 = arith.constant 0 : i32
    %2 = vector.broadcast %c0_i32 : i32 to vector<2x128xi32>
    %3 = arith.cmpi sge, %1, %2 : vector<2x128xi32>
    %c0_i32_2 = arith.constant 0 : i32
    %4 = vector.broadcast %c0_i32_2 : i32 to vector<2x128xi32>
    %5 = arith.cmpi ne, %1, %4 : vector<2x128xi32>
    %c15_i32 = arith.constant 15 : i32
    %6 = vector.broadcast %c15_i32 : i32 to vector<2x128xi32>
    %7 = arith.cmpi ne, %1, %6 : vector<2x128xi32>
    %8 = arith.andi %5, %7 : vector<2x128xi1>
    %9 = arith.andi %3, %8 : vector<2x128xi1>
    %c0_i32_3 = arith.constant 0 : i32
    %10 = vector.broadcast %c0_i32_3 : i32 to vector<2x128xi32>
    %11 = arith.select %9, %1, %10 : vector<2x128xi1>, vector<2x128xi32>
    %c0_4 = arith.constant 0 : index
    %c0_5 = arith.constant 0 : index
    %c0_6 = arith.constant 0 : index
    %c0_7 = arith.constant 0 : index
    %12 = vector.load %arg2[%c0_4, %c0_5, %c0_6, %c0_7] : memref<1x4x2x128xf32, #tpu.memory_space<vmem>>, vector<1x1x2x128xf32>
    %13 = vector.shape_cast %12 : vector<1x1x2x128xf32> to vector<2x128xf32>
    %c0_8 = arith.constant 0 : index
    %c1 = arith.constant 1 : index
    %c0_9 = arith.constant 0 : index
    %c0_10 = arith.constant 0 : index
    %14 = vector.load %arg2[%c0_8, %c1, %c0_9, %c0_10] : memref<1x4x2x128xf32, #tpu.memory_space<vmem>>, vector<1x1x2x128xf32>
    %15 = vector.shape_cast %14 : vector<1x1x2x128xf32> to vector<2x128xf32>
    %16 = arith.maximumf %13, %15 : vector<2x128xf32>
    %c0_11 = arith.constant 0 : index
    %c2 = arith.constant 2 : index
    %c0_12 = arith.constant 0 : index
    %c0_13 = arith.constant 0 : index
    %17 = vector.load %arg2[%c0_11, %c2, %c0_12, %c0_13] : memref<1x4x2x128xf32, #tpu.memory_space<vmem>>, vector<1x1x2x128xf32>
    %18 = vector.shape_cast %17 : vector<1x1x2x128xf32> to vector<2x128xf32>
    %19 = arith.maximumf %16, %18 : vector<2x128xf32>
    %c0_14 = arith.constant 0 : index
    %c3 = arith.constant 3 : index
    %c0_15 = arith.constant 0 : index
    %c0_16 = arith.constant 0 : index
    %20 = vector.load %arg2[%c0_14, %c3, %c0_15, %c0_16] : memref<1x4x2x128xf32, #tpu.memory_space<vmem>>, vector<1x1x2x128xf32>
    %21 = vector.shape_cast %20 : vector<1x1x2x128xf32> to vector<2x128xf32>
    %22 = arith.maximumf %19, %21 : vector<2x128xf32>
    %cst = arith.constant 0.000000e+00 : f32
    %23 = vector.broadcast %cst : f32 to vector<2x128xf32>
    %cst_17 = arith.constant 0.000000e+00 : f32
    %24 = vector.broadcast %cst_17 : f32 to vector<2x128xf32>
    %cst_18 = arith.constant 0.000000e+00 : f32
    %25 = vector.broadcast %cst_18 : f32 to vector<2x128xf32>
    %c0_19 = arith.constant 0 : index
    %c0_20 = arith.constant 0 : index
    %c0_21 = arith.constant 0 : index
    %c0_22 = arith.constant 0 : index
    %26 = vector.load %arg2[%c0_19, %c0_20, %c0_21, %c0_22] : memref<1x4x2x128xf32, #tpu.memory_space<vmem>>, vector<1x1x2x128xf32>
    %27 = vector.shape_cast %26 : vector<1x1x2x128xf32> to vector<2x128xf32>
    %28 = arith.subf %27, %22 : vector<2x128xf32>
    %29 = math.exp %28 : vector<2x128xf32>
    %30 = arith.addf %23, %29 : vector<2x128xf32>
    %c0_i32_23 = arith.constant 0 : i32
    %31 = vector.broadcast %c0_i32_23 : i32 to vector<2x128xi32>
    %32 = arith.cmpi eq, %11, %31 : vector<2x128xi32>
    %33 = arith.select %32, %28, %24 : vector<2x128xi1>, vector<2x128xf32>
    %cst_24 = arith.constant 1.000000e-01 : f32
    %34 = vector.broadcast %cst_24 : f32 to vector<2x128xf32>
    %35 = arith.select %32, %34, %25 : vector<2x128xi1>, vector<2x128xf32>
    %c0_25 = arith.constant 0 : index
    %c1_26 = arith.constant 1 : index
    %c0_27 = arith.constant 0 : index
    %c0_28 = arith.constant 0 : index
    %36 = vector.load %arg2[%c0_25, %c1_26, %c0_27, %c0_28] : memref<1x4x2x128xf32, #tpu.memory_space<vmem>>, vector<1x1x2x128xf32>
    %37 = vector.shape_cast %36 : vector<1x1x2x128xf32> to vector<2x128xf32>
    %38 = arith.subf %37, %22 : vector<2x128xf32>
    %39 = math.exp %38 : vector<2x128xf32>
    %40 = arith.addf %30, %39 : vector<2x128xf32>
    %c1_i32 = arith.constant 1 : i32
    %41 = vector.broadcast %c1_i32 : i32 to vector<2x128xi32>
    %42 = arith.cmpi eq, %11, %41 : vector<2x128xi32>
    %43 = arith.select %42, %38, %33 : vector<2x128xi1>, vector<2x128xf32>
    %cst_29 = arith.constant 2.000000e-01 : f32
    %44 = vector.broadcast %cst_29 : f32 to vector<2x128xf32>
    %45 = arith.select %42, %44, %35 : vector<2x128xi1>, vector<2x128xf32>
    %c0_30 = arith.constant 0 : index
    %c2_31 = arith.constant 2 : index
    %c0_32 = arith.constant 0 : index
    %c0_33 = arith.constant 0 : index
    %46 = vector.load %arg2[%c0_30, %c2_31, %c0_32, %c0_33] : memref<1x4x2x128xf32, #tpu.memory_space<vmem>>, vector<1x1x2x128xf32>
    %47 = vector.shape_cast %46 : vector<1x1x2x128xf32> to vector<2x128xf32>
    %48 = arith.subf %47, %22 : vector<2x128xf32>
    %49 = math.exp %48 : vector<2x128xf32>
    %50 = arith.addf %40, %49 : vector<2x128xf32>
    %c2_i32 = arith.constant 2 : i32
    %51 = vector.broadcast %c2_i32 : i32 to vector<2x128xi32>
    %52 = arith.cmpi eq, %11, %51 : vector<2x128xi32>
    %53 = arith.select %52, %48, %43 : vector<2x128xi1>, vector<2x128xf32>
    %cst_34 = arith.constant 3.000000e-01 : f32
    %54 = vector.broadcast %cst_34 : f32 to vector<2x128xf32>
    %55 = arith.select %52, %54, %45 : vector<2x128xi1>, vector<2x128xf32>
    %c0_35 = arith.constant 0 : index
    %c3_36 = arith.constant 3 : index
    %c0_37 = arith.constant 0 : index
    %c0_38 = arith.constant 0 : index
    %56 = vector.load %arg2[%c0_35, %c3_36, %c0_37, %c0_38] : memref<1x4x2x128xf32, #tpu.memory_space<vmem>>, vector<1x1x2x128xf32>
    %57 = vector.shape_cast %56 : vector<1x1x2x128xf32> to vector<2x128xf32>
    %58 = arith.subf %57, %22 : vector<2x128xf32>
    %59 = math.exp %58 : vector<2x128xf32>
    %60 = arith.addf %50, %59 : vector<2x128xf32>
    %c3_i32 = arith.constant 3 : i32
    %61 = vector.broadcast %c3_i32 : i32 to vector<2x128xi32>
    %62 = arith.cmpi eq, %11, %61 : vector<2x128xi32>
    %63 = arith.select %62, %58, %53 : vector<2x128xi1>, vector<2x128xf32>
    %cst_39 = arith.constant 4.000000e-01 : f32
    %64 = vector.broadcast %cst_39 : f32 to vector<2x128xf32>
    %65 = arith.select %62, %64, %55 : vector<2x128xi1>, vector<2x128xf32>
    %66 = math.log %60 : vector<2x128xf32>
    %67 = arith.subf %63, %66 : vector<2x128xf32>
    %68 = math.exp %67 : vector<2x128xf32>
    %69 = arith.mulf %67, %65 : vector<2x128xf32>
    %cst_40 = arith.constant 1.000000e+00 : f32
    %70 = vector.broadcast %cst_40 : f32 to vector<2x128xf32>
    %71 = arith.subf %70, %68 : vector<2x128xf32>
    %cst_41 = arith.constant 0.000000e+00 : f32
    %72 = vector.broadcast %cst_41 : f32 to vector<2x128xf32>
    %73 = arith.maximumf %71, %72 : vector<2x128xf32>
    %74 = arith.mulf %73, %73 : vector<2x128xf32>
    %75 = arith.mulf %74, %69 : vector<2x128xf32>
    %cst_42 = arith.constant 0.000000e+00 : f32
    %76 = vector.broadcast %cst_42 : f32 to vector<2x128xf32>
    %77 = arith.select %3, %75, %76 : vector<2x128xi1>, vector<2x128xf32>
    %78 = vector.shape_cast %77 : vector<2x128xf32> to vector<1x2x128xf32>
    %cst_43 = arith.constant dense<0.000000e+00> : vector<1xf32>
    %79 = vector.multi_reduction <add>, %78, %cst_43 [1, 2] : vector<1x2x128xf32> to vector<1xf32>
    %80 = vector.shape_cast %79 : vector<1xf32> to vector<1x1x1xf32>
    %81 = vector.extract %80[0, 0, 0] : f32 from vector<1x1x1xf32>
    %82 = vector.broadcast %81 : f32 to vector<1x1xf32>
    %cst_44 = arith.constant 0.000000e+00 : f32
    %83 = vector.broadcast %cst_44 : f32 to vector<1x1xf32>
    %84 = arith.subf %83, %82 : vector<1x1xf32>
    %c0_45 = arith.constant 0 : index
    %c0_46 = arith.constant 0 : index
    %c0_47 = arith.constant 0 : index
    %c0_48 = arith.constant 0 : index
    %85 = vector.load %arg4[%c0_45, %c0_46, %c0_47, %c0_48] : memref<1x1x1x1xf32, #tpu.memory_space<vmem>>, vector<1x1x1x1xf32>
    %86 = vector.shape_cast %85 : vector<1x1x1x1xf32> to vector<1x1xf32>
    %87 = vector.shape_cast %84 : vector<1x1xf32> to vector<1x1x1x1xf32>
    tpu.vector_store %arg4[%c0_45, %c0_46, %c0_47, %c0_48], %87 {strides = array<i32>} : memref<1x1x1x1xf32, #tpu.memory_space<vmem>>, vector<1x1x1x1xf32>,
    return
  }
  func.func @transform_0(%arg0: i32, %arg1: i32) -> (i32, i32, i32, i32) {
    %c0_i32 = arith.constant 0 : i32
    %c0_i32_0 = arith.constant 0 : i32
    %c0_i32_1 = arith.constant 0 : i32
    return %arg0, %c0_i32, %arg1, %c0_i32_0 : i32, i32, i32, i32
  }
  func.func @transform_1(%arg0: i32, %arg1: i32) -> (i32, i32, i32) {
    %c0_i32 = arith.constant 0 : i32
    %c0_i32_0 = arith.constant 0 : i32
    return %arg0, %arg1, %c0_i32 : i32, i32, i32
  }
  func.func @transform_2(%arg0: i32, %arg1: i32) -> (i32, i32, i32, i32) {
    %c0_i32 = arith.constant 0 : i32
    %c0_i32_0 = arith.constant 0 : i32
    %c0_i32_1 = arith.constant 0 : i32
    return %arg0, %arg1, %c0_i32, %c0_i32_0 : i32, i32, i32, i32
  }
}

</mosaic_0001>

<llo_original>
// kernel: tpu_custom_call.1
$region0: #{tpu_custom_call.1}
  #allocation0 [shape = 'u32[]', space=smem, size = 0x4, offset = 0x4, fixed_abs, tag = 'smem constant byte address 0x4 - core index']
  #allocation1 [shape = 'u32[144,128]{1,0:T(1,128)}', space=vmem, size = 0x12000, scoped, tag = 'internal scratch']
  %s0 = inlined_call_operand.hbm [shape: f32[2,4,2,128], index: 0, kind: input, shape index: {}]
  %s1 = inlined_call_operand.hbm [shape: s32[2,2,128], index: 1, kind: input, shape index: {}]
  %s2 = inlined_call_operand.vmem [shape: f32[2,1,1,1], index: 2, kind: output, shape index: {}]
  %s3 = sld [smem:[#allocation0]]
  $region49: #{tpu_custom_call.1} parent=0
    _
  %s5 = ssub.s32 1, %s3
  %s6 = scalar_select 0, %s5, %s3
  $region1: #{tpu_custom_call.1} parent=0
    #allocation2 [shape = 'u8[8192]{0}', space=vmem, size = 0x2000, scoped, tag = 'input window, operand 0']
    #allocation3 [shape = 's32[2]{0}', space=sflag, size = 0x8, scoped, tag = 'scoped memory for tpu_custom_call.1']
    #allocation4 [shape = 'u8[2048]{0}', space=vmem, size = 0x800, scoped, tag = 'input window, operand 1']
    #allocation5 [shape = 's32[2]{0}', space=sflag, size = 0x8, scoped, tag = 'scoped memory for tpu_custom_call.1']
    %7 = vsyncpa [#allocation3], 0
    %s8 = scalar_lea.sflag [#allocation3], 1
    %9 = vsyncpa %s8, 0
    %10 = vsyncpa [#allocation5], 0
    %s11 = scalar_lea.sflag [#allocation5], 1
    %12 = vsyncpa %s11, 0
    loop: start=0, step=1, limit=4
    $region2: #{tpu_custom_call.1} parent=1 // loop_pre_header
      _
    $region3: #{tpu_custom_call.1} parent=1 // loop_header
      %s14 = sphi 0, %s18
      %p15 = scmp.ge.s32.totalorder %s14, 4
      %s21 = sphi 0, %s33
      %s22 = sphi 0, %s29
      %s23 = sphi 0, %s21
      %s24 = sphi 0, %s22
      %s25 = sphi 0, %s23
      %s26 = sphi 0, %s24
      %s38 = sphi 0, %s40
      %s41 = sphi 0, %s38
      %s42 = sphi 0, %s41
      %s58 = sphi 0, %s42
      %s66 = sphi 0, %s68
      %s69 = sphi 0, %s66
      %s70 = sphi 0, %s69
      %s86 = sphi 0, %s70
      %s94 = sphi 0, %s96
      %s97 = sphi 0, %s94
      %s98 = sphi 0, %s97
      %s114 = sphi 0, %s98
    $region4: #{tpu_custom_call.1} parent=1 // loop_header_branch
      %17 = sbr.rel (%p15) target = $region8
    $region5: #{tpu_custom_call.1} parent=1 // loop_body
      %s19 = ssub.s32 %s14, 1
      %s20 = ssub.s32 %s14, 2
      %s27 = sadd.s32 1, %s22
      %p28 = scmp.ge.s32.totalorder %s27, 1
      %s29 = scalar_select %p28, 0, %s27
      %s30 = sadd.s32 1, %s21
      %s31 = scalar_select %p28, %s30, %s21
      %p32 = scmp.ge.s32.totalorder %s31, 2
      %s33 = scalar_select %p32, 0, %s31
      %s34 = ssub.s32 %s21, %s33
      %s35 = ssub.s32 %s22, %s29
      %s36 = sor.u32 %s34, %s35
      %p37 = scmp.eq.s32.totalorder %s36, 0
      %s39 = sadd.s32 %s38, 1
      %s40 = scalar_select %p37, %s38, %s39
      %p43 = pneg %p37
      %p44 = scmp.eq.s32.totalorder %s14, 1
      %p45 = por %p43, %p44
      %p46 = scmp.ne.s32.totalorder %s38, %s41
      %p47 = scmp.eq.s32.totalorder %s14, 0
      %p48 = por %p46, %p47
      %p49 = scmp.ne.s32.totalorder %s38, %s41
      %p50 = scmp.eq.s32.totalorder %s19, 1
      %p51 = por %p49, %p50
      %p52 = scmp.ne.s32.totalorder %s41, %s42
      %p53 = scmp.eq.s32.totalorder %s19, 0
      %p54 = por %p52, %p53
      %p55 = scmp.ne.s32.totalorder %s41, %s42
      %p56 = scmp.eq.s32.totalorder %s20, 1
      %p57 = por %p55, %p56
      %p59 = scmp.ne.s32.totalorder %s42, %s58
      %p60 = scmp.eq.s32.totalorder %s20, 0
      %p61 = por %p59, %p60
      %s62 = ssub.s32 %s21, %s33
      %s63 = ssub.s32 %s22, %s29
      %s64 = sor.u32 %s62, %s63
      %p65 = scmp.eq.s32.totalorder %s64, 0
      %s67 = sadd.s32 %s66, 1
      %s68 = scalar_select %p65, %s66, %s67
      %p71 = pneg %p65
      %p72 = scmp.eq.s32.totalorder %s14, 1
      %p73 = por %p71, %p72
      %p74 = scmp.ne.s32.totalorder %s66, %s69
      %p75 = scmp.eq.s32.totalorder %s14, 0
      %p76 = por %p74, %p75
      %p77 = scmp.ne.s32.totalorder %s66, %s69
      %p78 = scmp.eq.s32.totalorder %s19, 1
      %p79 = por %p77, %p78
      %p80 = scmp.ne.s32.totalorder %s69, %s70
      %p81 = scmp.eq.s32.totalorder %s19, 0
      %p82 = por %p80, %p81
      %p83 = scmp.ne.s32.totalorder %s69, %s70
      %p84 = scmp.eq.s32.totalorder %s20, 1
      %p85 = por %p83, %p84
      %p87 = scmp.ne.s32.totalorder %s70, %s86
      %p88 = scmp.eq.s32.totalorder %s20, 0
      %p89 = por %p87, %p88
      %s90 = ssub.s32 %s21, %s33
      %s91 = ssub.s32 %s22, %s29
      %s92 = sor.u32 %s90, %s91
      %p93 = scmp.eq.s32.totalorder %s92, 0
      %s95 = sadd.s32 %s94, 1
      %s96 = scalar_select %p93, %s94, %s95
      %p99 = pneg %p93
      %p100 = scmp.eq.s32.totalorder %s14, 1
      %p101 = por %p99, %p100
      %p102 = scmp.ne.s32.totalorder %s94, %s97
      %p103 = scmp.eq.s32.totalorder %s14, 0
      %p104 = por %p102, %p103
      %p105 = scmp.ne.s32.totalorder %s94, %s97
      %p106 = scmp.eq.s32.totalorder %s19, 1
      %p107 = por %p105, %p106
      %p108 = scmp.ne.s32.totalorder %s97, %s98
      %p109 = scmp.eq.s32.totalorder %s19, 0
      %p110 = por %p108, %p109
      %p111 = scmp.ne.s32.totalorder %s97, %s98
      %p112 = scmp.eq.s32.totalorder %s20, 1
      %p113 = por %p111, %p112
      %p115 = scmp.ne.s32.totalorder %s98, %s114
      %p116 = scmp.eq.s32.totalorder %s20, 0
      %p117 = por %p115, %p116
      %p118 = scmp.le.s32.totalorder 1, %s14
      %p119 = scmp.lt.s32.totalorder %s14, 3
      %p120 = pnand %p118, %p119
      %p121 = pneg %p120
      // Predicated region
      $region9: #{tpu_custom_call.1} parent=5 // pred_check
        _
      $region10: #{tpu_custom_call.1} parent=5 // pred_check_branch
        %123 = sbr.rel (%p120) target = $region12
      $region11: #{tpu_custom_call.1} parent=5 // pred_region
        %s124 = ssub.s32 %s14, 1
      $region12: #{tpu_custom_call.1} parent=5 // pred_fallthru
        _
      %p125 = scmp.lt.s32.totalorder %s14, 2
      // Predicated region
      $region13: #{tpu_custom_call.1} parent=5 // pred_check
        %p126 = pneg %p125
      $region14: #{tpu_custom_call.1} parent=5 // pred_check_branch
        %128 = sbr.rel (%p126) target = $region16
      $region15: #{tpu_custom_call.1} parent=5 // pred_region
        // Predicated region
        $region17: #{tpu_custom_call.1} parent=15 // pred_check
          %p129 = pneg %p48
        $region18: #{tpu_custom_call.1} parent=15 // pred_check_branch
          %131 = sbr.rel (%p129) target = $region20
        $region19: #{tpu_custom_call.1} parent=15 // pred_region
          %s132 = sand.u32 %s38, 1
          %s133 = scalar_lea.sflag [#allocation3], %s132
          %s134 = sand.u32 %s38, 1
          %s135 = smul.addr %s134, 8
          %s136 = scalar_lea.vmem [#allocation2], %s135
          %s138 = ssub.s32 128, 128
          %139 = vsyncadd %s133, %s138
          %s140 = smul.addr %s21, 4
          %s141 = sadd.s32 %s22, %s140
          %s142 = smul.addr %s141, 32
          %s143 = scalar_lea.hbm %s0, %s142
          %s144 = sshll.u32 %s136, 4
          %s145 = int_to_ptr.vmem [resolvable:$true] %s144
          %150 = dma.hbm_to_vmem [thread:$0]  %s143, 128, %s145, %s133, 32, 32, 2
        $region20: #{tpu_custom_call.1} parent=15 // pred_fallthru
          _
        // Predicated region
        $region21: #{tpu_custom_call.1} parent=15 // pred_check
          %p151 = pneg %p76
        $region22: #{tpu_custom_call.1} parent=15 // pred_check_branch
          %153 = sbr.rel (%p151) target = $region24
        $region23: #{tpu_custom_call.1} parent=15 // pred_region
          %s154 = sand.u32 %s66, 1
          %s155 = scalar_lea.sflag [#allocation5], %s154
          %s156 = sand.u32 %s66, 1
          %s157 = smul.addr %s156, 2
          %s158 = scalar_lea.vmem [#allocation4], %s157
          %s160 = ssub.s32 32, 32
          %161 = vsyncadd %s155, %s160
          %s162 = sadd.s32 %s22, %s21
          %s163 = smul.addr %s162, 32
          %s164 = scalar_lea.hbm %s1, %s163
          %s166 = sshll.u32 %s158, 4
          %s167 = int_to_ptr.vmem [resolvable:$true] %s166
          %169 = dma.hbm_to_vmem [thread:$0]  %s164, 32, %s167, %s155
        $region24: #{tpu_custom_call.1} parent=15 // pred_fallthru
          _
      $region16: #{tpu_custom_call.1} parent=5 // pred_fallthru
        _
      %p170 = scmp.le.s32.totalorder 1, %s14
      %p171 = scmp.lt.s32.totalorder %s14, 3
      %p172 = pnand %p170, %p171
      %p173 = pneg %p172
      // Predicated region
      $region25: #{tpu_custom_call.1} parent=5 // pred_check
        _
      $region26: #{tpu_custom_call.1} parent=5 // pred_check_branch
        %175 = sbr.rel (%p172) target = $region28
      $region27: #{tpu_custom_call.1} parent=5 // pred_region
        %s176 = ssub.s32 %s14, 1
        %s177 = sand.u32 %s41, 1
        %s178 = scalar_lea.sflag [#allocation3], %s177
        %s179 = sand.u32 %s41, 1
        %s180 = smul.addr %s179, 8
        %s181 = scalar_lea.vmem [#allocation2], %s180
        // Predicated region
        $region29: #{tpu_custom_call.1} parent=27 // pred_check
          %p182 = pneg %p54
        $region30: #{tpu_custom_call.1} parent=27 // pred_check_branch
          %184 = sbr.rel (%p182) target = $region32
        $region31: #{tpu_custom_call.1} parent=27 // pred_region
          %185 = dma.done %s178, 128
        $region32: #{tpu_custom_call.1} parent=27 // pred_fallthru
          _
        %s186 = sand.u32 %s69, 1
        %s187 = scalar_lea.sflag [#allocation5], %s186
        %s188 = sand.u32 %s69, 1
        %s189 = smul.addr %s188, 2
        %s190 = scalar_lea.vmem [#allocation4], %s189
        // Predicated region
        $region33: #{tpu_custom_call.1} parent=27 // pred_check
          %p191 = pneg %p82
        $region34: #{tpu_custom_call.1} parent=27 // pred_check_branch
          %193 = sbr.rel (%p191) target = $region36
        $region35: #{tpu_custom_call.1} parent=27 // pred_region
          %194 = dma.done %s187, 32
        $region36: #{tpu_custom_call.1} parent=27 // pred_fallthru
          _
        %s195 = sand.u32 %s41, 1
        %s196 = scalar_lea.sflag [#allocation3], %s195
        %s197 = sand.u32 %s41, 1
        %s198 = smul.addr %s197, 8
        %s199 = scalar_lea.vmem [#allocation2], %s198
        %p200 = pneg %p54
        %p201 = pneg %p51
        %s202 = sand.u32 %s69, 1
        %s203 = scalar_lea.sflag [#allocation5], %s202
        %s204 = sand.u32 %s69, 1
        %s205 = smul.addr %s204, 2
        %s206 = scalar_lea.vmem [#allocation4], %s205
        %p207 = pneg %p82
        %p208 = pneg %p79
        %p209 = pneg %p110
        %p210 = pneg %p107
        %p211 = scmp.lt.s32.totalorder %s23, 1
        %s212 = scalar_select %p211, %s23, 1
        %p213 = scmp.lt.s32.totalorder %s24, 0
        %s214 = scalar_select %p213, %s24, 0
        %s215 = sadd.s32 %s214, %s212
        %s216 = scalar_lea.vmem %s2, %s215
        %p217 = scmp.lt.s32.totalorder %s23, 1
        %s218 = scalar_select %p217, %s23, 1
        %p219 = scmp.lt.s32.totalorder %s24, 0
        %s220 = scalar_select %p219, %s24, 0
        %s221 = sadd.s32 %s220, %s218
        %s222 = scalar_lea.vmem %s2, %s221
        %v223 = vld [vmem:[%s190] sm:$0x3]
        %vm224 = vcmp.ge.s32.totalorder %v223, 0
        %vm225 = vcmp.ne.s32.totalorder %v223, 0
        %vm226 = vcmp.ne.s32.totalorder %v223, 15
        %vm227 = vmand %vm225, %vm226
        %vm228 = vmand %vm224, %vm227
        %v229 = vsel %vm228, %v223, 0
        %v230 = vld [vmem:[%s181] sm:$0x3]
        %s231 = scalar_lea.vmem %s181, 2 [#allocation2]
        %v232 = vld [vmem:[%s231] sm:$0x3]
        %v233 = vmax.f32 %v230, %v232
        %s234 = scalar_lea.vmem %s181, 4 [#allocation2]
        %v235 = vld [vmem:[%s234] sm:$0x3]
        %v236 = vmax.f32 %v233, %v235
        %s237 = scalar_lea.vmem %s181, 6 [#allocation2]
        %v238 = vld [vmem:[%s237] sm:$0x3]
        %v239 = vmax.f32 %v236, %v238
        %v240 = vsub.f32 %v230, %v239
        %v241 = vmul.f32 %v240, 1.442695
        %v242 = vpow.pop %v241
        %v243 = vadd.f32 %v242, 0.0
        %vm244 = vcmp.eq.s32.totalorder %v229, 0
        %v245 = vsel %vm244, %v240, 0.0
        %v246 = vsel %vm244, 0.1, 0.0
        %v247 = vsub.f32 %v232, %v239
        %v248 = vmul.f32 %v247, 1.442695
        %v249 = vpow.pop %v248
        %v250 = vadd.f32 %v243, %v249
        %vm251 = vcmp.eq.s32.totalorder %v229, 1
        %v252 = vsel %vm251, %v247, %v245
        %v253 = vsel %vm251, 0.2, %v246
        %v254 = vsub.f32 %v235, %v239
        %v255 = vmul.f32 %v254, 1.442695
        %v256 = vpow.pop %v255
        %v257 = vadd.f32 %v250, %v256
        %vm258 = vcmp.eq.s32.totalorder %v229, 2
        %v259 = vsel %vm258, %v254, %v252
        %v260 = vsel %vm258, 0.3, %v253
        %v261 = vsub.f32 %v238, %v239
        %v262 = vmul.f32 %v261, 1.442695
        %v263 = vpow.pop %v262
        %v264 = vadd.f32 %v257, %v263
        %vm265 = vcmp.eq.s32.totalorder %v229, 3
        %v266 = vsel %vm265, %v261, %v259
        %v267 = vsel %vm265, 0.4, %v260
        %v268 = vlog2.pop %v264
        %v269 = vmul.f32 %v268, 0.6931472
        %v270 = vsub.f32 %v266, %v269
        %v271 = vmul.f32 %v270, 1.442695
        %v272 = vpow.pop %v271
        %v273 = vmul.f32 %v270, %v267
        %v274 = vsub.f32 1.0, %v272
        %v275 = vmax.f32 %v274, 0.0
        %v276 = vmul.f32 %v275, %v275
        %v277 = vmul.f32 %v276, %v273
        %v278 = vsel %vm224, %v277, 0.0
        %vm279 = vcmask 1041408
        %v280 = vsel %vm279, %v278, 0.0
        %281 = vadd.xlane.f32.xlu0 %v280
        %v282 = vpop.xlane.xlu0 %281
        %v283 = vrot.slane %v282, 4
        %v284 = vadd.f32 %v282, %v283
        %v285 = vrot.slane %v284, 2
        %v286 = vadd.f32 %v284, %v285
        %v287 = vrot.slane %v286, 1
        %v288 = vadd.f32 %v286, %v287
        %s289 = vtos %v288
        %v290 = vstv %s289
        %v291 = vsub.f32 0.0, %v290
        %vm292 = vcmask 0
        %293 = vst.msk [vmem:[%s222] sm:$0x1] %vm292, %v291
        %p294 = scmp.lt.s32.totalorder %s23, 1
        %s295 = scalar_select %p294, %s23, 1
        %p296 = scmp.lt.s32.totalorder %s24, 0
        %s297 = scalar_select %p296, %s24, 0
        %s298 = sadd.s32 %s297, %s295
        %s299 = scalar_lea.vmem %s2, %s298
        // Predicated region
        $region37: #{tpu_custom_call.1} parent=27 // pred_check
          %p300 = pneg %p107
        $region38: #{tpu_custom_call.1} parent=27 // pred_check_branch
          %302 = sbr.rel (%p300) target = $region40
        $region39: #{tpu_custom_call.1} parent=27 // pred_region
          _
        $region40: #{tpu_custom_call.1} parent=27 // pred_fallthru
          _
      $region28: #{tpu_custom_call.1} parent=5 // pred_fallthru
        _
      %p303 = scmp.le.s32.totalorder 2, %s14
      // Predicated region
      $region41: #{tpu_custom_call.1} parent=5 // pred_check
        %p304 = pneg %p303
      $region42: #{tpu_custom_call.1} parent=5 // pred_check_branch
        %306 = sbr.rel (%p304) target = $region44
      $region43: #{tpu_custom_call.1} parent=5 // pred_region
        %s307 = ssub.s32 %s14, 2
        // Predicated region
        $region45: #{tpu_custom_call.1} parent=43 // pred_check
          %p308 = pneg %p113
        $region46: #{tpu_custom_call.1} parent=43 // pred_check_branch
          %310 = sbr.rel (%p308) target = $region48
        $region47: #{tpu_custom_call.1} parent=43 // pred_region
          %p311 = scmp.lt.s32.totalorder %s25, 1
          %s312 = scalar_select %p311, %s25, 1
          %p313 = scmp.lt.s32.totalorder %s26, 0
          %s314 = scalar_select %p313, %s26, 0
          %s315 = sadd.s32 %s314, %s312
          %s316 = scalar_lea.vmem %s2, %s315
        $region48: #{tpu_custom_call.1} parent=43 // pred_fallthru
          _
      $region44: #{tpu_custom_call.1} parent=5 // pred_fallthru
        _
    $region6: #{tpu_custom_call.1} parent=1 // loop_footer
      %s18 = sadd.s32 1, %s14
    $region7: #{tpu_custom_call.1} parent=1 // loop_footer_branch
      %13 = sbr.rel target = $region3
    $region8: #{tpu_custom_call.1} parent=1 // loop_exit
      _
    %317 = vsyncpa [#allocation3], 1
    %s318 = scalar_lea.sflag [#allocation3], 1
    %319 = vsyncpa %s318, 1
    %320 = vsyncpa [#allocation5], 1
    %s321 = scalar_lea.sflag [#allocation5], 1
    %322 = vsyncpa %s321, 1

</llo_original>
